<compile_context>
chip_gen: v7x
topology: tpu7x:2x2x1
jax: 0.10.0
libtpu: 0.0.40
codegen_flags: <defaults>
</compile_context>

<pallas_src>
import functools

import jax
import jax.numpy as jnp
from jax import lax
from jax.experimental import pallas as pl
from jax.experimental.pallas import tpu as pltpu


def _pool_factor(quant_factor):
    # nn.MaxPool1d(4) followed by max(1, quant_factor) x nn.MaxPool1d(2); the
    # non-overlapping pools (stride == kernel) compose into one pool of size P.
    return 4 * (2 ** max(1, quant_factor))


def _audio_embed_kernel(x_ref, w_ref, b_ref, o_ref, pooled_ref, *, pool):
    """One (batch-block, time-tile) grid step.

    x_ref:      (BBLK, C, BW)       raw NCW samples, BW >= TILE_T * pool
    w_ref:      (dim, C)            Linear.weight
    b_ref:      (dim, 1)            Linear.bias as a column
    o_ref:      (BBLK, dim, TILE_T) output block (NCW orientation)
    pooled_ref: (BBLK*TILE_T, C)    VMEM scratch holding the pooled frames
    """
    bblk, c, _ = x_ref.shape
    tile_t = o_ref.shape[2]

    # Frames per in-register chunk: keep the transposed chunk (cw x C) small
    # enough to stay in vregs -- the full pre-pooled tile is never relayouted.
    fpc = max(1, min(tile_t, 256 // pool))
    if tile_t % fpc:
        fpc = tile_t  # rare ragged small-Tp case: one chunk per batch element
    n_chunks = tile_t // fpc
    cw = fpc * pool

    def pool_chunk(b, g):
        # g may be a traced loop index or a Python int.
        col0 = pl.multiple_of(g * cw, cw)
        xc = x_ref[b, :, pl.ds(col0, cw)]                 # (C, cw) contiguous
        xt = jnp.transpose(xc, (1, 0))                    # (cw, C) in-register
        pm = jnp.max(xt.reshape(fpc, pool, c), axis=1)    # fused MaxPool chain
        row0 = pl.multiple_of(b * tile_t + g * fpc, fpc)
        pooled_ref[pl.ds(row0, fpc), :] = pm

    for b in range(bblk):
        if n_chunks == 1:
            pool_chunk(b, 0)
        else:
            def body(g, carry, b=b):
                pool_chunk(b, g)
                return carry

            lax.fori_loop(0, n_chunks, body, 0)

    # Projection: (dim, C) x (BBLK*TILE_T, C) contracting C -> (dim, BBLK*TILE_T).
    # Output is lane-dense and already in the module's (dim, time) orientation.
    prec = lax.Precision.HIGHEST if w_ref.dtype == jnp.float32 else None
    out = lax.dot_general(
        w_ref[...], pooled_ref[...],
        dimension_numbers=(((1,), (1,)), ((), ())),
        preferred_element_type=jnp.float32,
        precision=prec,
    ) + b_ref[...]

    for b in range(bblk):
        o_ref[b] = out[:, b * tile_t:(b + 1) * tile_t].astype(o_ref.dtype)


def audio_embedding_forward(x, weight, bias, quant_factor, *,
                            compute_dtype=None,
                            max_tile_t=2048,
                            vmem_budget_bytes=16 * 1024 * 1024):
    """x: (B, size, T), weight: (dim, size), bias: (dim,).

    Returns (B, dim, T') with T' = T // (4 * 2**max(1, quant_factor)), matching
    the PyTorch AudioEmbedding (version='v6') forward pass.
    """
    B, C, T = x.shape
    dim = weight.shape[0]
    assert weight.shape[1] == C, (weight.shape, C)
    P = _pool_factor(quant_factor)
    Tp = T // P
    assert Tp >= 1, "sequence too short for the pooling chain"

    if compute_dtype is not None:
        x = x.astype(compute_dtype)       # expected to fuse with the producer
    cdt = x.dtype
    itemsize = jnp.dtype(cdt).itemsize
    weight = weight.astype(cdt)
    bias2 = bias.astype(jnp.float32).reshape(dim, 1)

    # ---------------- tiling decisions (all static) ----------------
    if Tp < 128:
        # Small-Tp regime: single time tile, several batch elements per step.
        tile_t = Tp
        n_tiles = 1
        bblk = min(B, max(1, 256 // Tp))          # target MXU N ~ 256
        if B > 1:
            bblk = min(bblk, pl.cdiv(B, 2))       # keep >= 2 grid steps (v7x)
        bw = Tp * P
        if bw % 128 != 0 and bw != T:
            bw = T                                # single tile: full-T block is legal
    else:
        bblk = 1
        pad_c = ((C + 127) // 128) * 128          # pooled scratch is lane-padded
        per_t = (2 * C * P * itemsize             # double-buffered input block
                 + 2 * dim * 4                    # double-buffered output block
                 + pad_c * itemsize)              # pooled scratch
        cap = max(128, (vmem_budget_bytes // per_t) // 128 * 128)
        tile_t = min(cap, max_tile_t, (Tp // 128) * 128)
        # Keep >= 2 total grid steps so both v7x TensorCores get work.
        if B * pl.cdiv(Tp, tile_t) < 2 and tile_t > 128:
            tile_t = max(128, ((tile_t // 2) // 128) * 128)
        n_tiles = pl.cdiv(Tp, tile_t)
        bw = tile_t * P
    n_btiles = pl.cdiv(B, bblk)

    kernel = functools.partial(_audio_embed_kernel, pool=P)
    out = pl.pallas_call(
        kernel,
        out_shape=jax.ShapeDtypeStruct((B, dim, Tp), jnp.float32),
        grid_spec=pltpu.PrefetchScalarGridSpec(
            num_scalar_prefetch=0,
            grid=(n_btiles, n_tiles),
            in_specs=[
                pl.BlockSpec((bblk, C, bw), lambda bi, ti: (bi, 0, ti)),
                pl.BlockSpec((dim, C), lambda bi, ti: (0, 0)),
                pl.BlockSpec((dim, 1), lambda bi, ti: (0, 0)),
            ],
            out_specs=pl.BlockSpec((bblk, dim, tile_t), lambda bi, ti: (bi, 0, ti)),
            scratch_shapes=[pltpu.VMEM((bblk * tile_t, C), cdt)],
        ),
        compiler_params=pltpu.CompilerParams(
            dimension_semantics=("parallel", "parallel"),
            vmem_limit_bytes=32 * 1024 * 1024,
        ),
    )(x, weight, bias2)
    return out


def audio_embedding_reference(x, weight, bias, quant_factor):
    """Pure-JAX reference mirroring the PyTorch module (f32)."""
    B, C, T = x.shape
    P = _pool_factor(quant_factor)
    Tp = T // P
    xp = x[:, :, :Tp * P].reshape(B, C, Tp, P).max(axis=-1)          # (B, C, T')
    y = jnp.einsum("bct,dc->bdt", xp, weight,
                   precision=lax.Precision.HIGHEST) + bias[None, :, None]
    return y


if __name__ == "__main__":
    # Shapes consistent with the module: batch=2, size (audio feat)=32, seq
    # T=256, quant_factor=2 -> pool factor 16 -> T'=16, dim=16.
    B, SIZE, T = 2, 32, 256
    DIM, QF = 16, 2

    key = jax.random.PRNGKey(0)
    kx, kw, kb = jax.random.split(key, 3)
    x = jax.random.normal(kx, (B, SIZE, T), dtype=jnp.float32)
    weight = jax.random.normal(kw, (DIM, SIZE), dtype=jnp.float32) * 0.1
    bias = jax.random.normal(kb, (DIM,), dtype=jnp.float32) * 0.1

    ref = audio_embedding_reference(x, weight, bias, QF)

    # 1) Small-Tp regime (Tp = 16 < 128): batched grid steps, single time tile.
    out = jax.block_until_ready(audio_embedding_forward(x, weight, bias, QF))
    assert out.shape == (B, DIM, T // 16), out.shape
    assert jnp.allclose(out, ref, atol=2e-3, rtol=2e-3), float(
        jnp.max(jnp.abs(out - ref)))

    # 2) bf16 carry (memory-bound fast path), checked at bf16 tolerance.
    out_bf16 = jax.block_until_ready(
        audio_embedding_forward(x, weight, bias, QF, compute_dtype=jnp.bfloat16))
    assert jnp.allclose(out_bf16, ref, atol=5e-2, rtol=5e-2), float(
        jnp.max(jnp.abs(out_bf16 - ref)))

    # 3) Large-Tp regime with a ragged tail: time-tiled grid + boundary masking.
    T2 = 4144                       # Tp = 259 -> one full 256-frame tile + 3 frames
    x2 = jax.random.normal(kx, (B, SIZE, T2), dtype=jnp.float32)
    ref2 = audio_embedding_reference(x2, weight, bias, QF)
    out2 = jax.block_until_ready(audio_embedding_forward(x2, weight, bias, QF))
    assert out2.shape == ref2.shape, (out2.shape, ref2.shape)
    assert jnp.allclose(out2, ref2, atol=2e-3, rtol=2e-3), float(
        jnp.max(jnp.abs(out2 - ref2)))

    print("KERNEL_OK")
</pallas_src>

<mosaic_0001>
module attributes {stable_mosaic.version = 11 : i64} {
  func.func @_audio_embed_kernel(%arg0: i32, %arg1: i32, %arg2: memref<1x32x256xf32, #tpu.memory_space<vmem>>, %arg3: memref<16x32xf32, #tpu.memory_space<vmem>>, %arg4: memref<16x1xf32, #tpu.memory_space<vmem>>, %arg5: memref<1x16x16xf32, #tpu.memory_space<vmem>>, %arg6: memref<16x32xf32, #tpu.memory_space<vmem>>) attributes {dimension_semantics = [#tpu.dimension_semantics<parallel>, #tpu.dimension_semantics<parallel>], iteration_bounds = array<i64: 2, 1>, scalar_prefetch = 0 : i64, scratch_operands = 1 : i64, tpu.core_type = #tpu.core_type<tc>, window_params = [{transform_indices = @transform_0, window_bounds = array<i64: 1, 32, 256>}, {pipeline_mode = #tpu.pipeline_mode<synchronous>, transform_indices = @transform_1, window_bounds = array<i64: 16, 32>}, {pipeline_mode = #tpu.pipeline_mode<synchronous>, transform_indices = @transform_2, window_bounds = array<i64: 16, 1>}, {transform_indices = @transform_3, window_bounds = array<i64: 1, 16, 16>}]} {
    %c0_i32 = arith.constant 0 : i32
    %0 = tpu.assume_multiple %c0_i32, 256 : i32
    %c0 = arith.constant 0 : index
    %c0_0 = arith.constant 0 : index
    %1 = arith.index_cast %0 : i32 to index
    %2 = vector.load %arg2[%c0, %c0_0, %1] : memref<1x32x256xf32, #tpu.memory_space<vmem>>, vector<1x32x256xf32>
    %3 = vector.shape_cast %2 : vector<1x32x256xf32> to vector<32x256xf32>
    %4 = tpu.transpose %3, [1, 0] : vector<32x256xf32> -> vector<256x32xf32>
    %5 = vector.shape_cast %4 : vector<256x32xf32> to vector<16x16x32xf32>
    %cst = arith.constant dense<0xFF800000> : vector<16x32xf32>
    %6 = vector.multi_reduction <maximumf>, %5, %cst [1] : vector<16x16x32xf32> to vector<16x32xf32>
    %c0_i32_1 = arith.constant 0 : i32
    %7 = tpu.assume_multiple %c0_i32_1, 16 : i32
    %8 = arith.index_cast %7 : i32 to index
    %c0_2 = arith.constant 0 : index
    %9 = vector.load %arg6[%8, %c0_2] : memref<16x32xf32, #tpu.memory_space<vmem>>, vector<16x32xf32>
    tpu.vector_store %arg6[%8, %c0_2], %6 {strides = array<i32>} : memref<16x32xf32, #tpu.memory_space<vmem>>, vector<16x32xf32>,
    %c0_3 = arith.constant 0 : index
    %c0_4 = arith.constant 0 : index
    %10 = vector.load %arg3[%c0_3, %c0_4] : memref<16x32xf32, #tpu.memory_space<vmem>>, vector<16x32xf32>
    %c0_5 = arith.constant 0 : index
    %c0_6 = arith.constant 0 : index
    %11 = vector.load %arg6[%c0_5, %c0_6] : memref<16x32xf32, #tpu.memory_space<vmem>>, vector<16x32xf32>
    %cst_7 = arith.constant dense<0.000000e+00> : vector<16x16xf32>
    %12 = tpu.matmul %10, %11, %cst_7 {dimension_numbers = #tpu.dot_dimension_numbers<[1], [1], [0], [0], [0, 0, 1, 0], [], []>, precision = #tpu.contract_precision<fp32>} : vector<16x32xf32>, vector<16x32xf32>, vector<16x16xf32> -> vector<16x16xf32>
    %c0_8 = arith.constant 0 : index
    %c0_9 = arith.constant 0 : index
    %13 = vector.load %arg4[%c0_8, %c0_9] : memref<16x1xf32, #tpu.memory_space<vmem>>, vector<16x1xf32>
    %14 = vector.broadcast %13 : vector<16x1xf32> to vector<16x16xf32>
    %15 = arith.addf %12, %14 : vector<16x16xf32>
    %c0_10 = arith.constant 0 : index
    %c0_11 = arith.constant 0 : index
    %c0_12 = arith.constant 0 : index
    %16 = vector.load %arg5[%c0_10, %c0_11, %c0_12] : memref<1x16x16xf32, #tpu.memory_space<vmem>>, vector<1x16x16xf32>
    %17 = vector.shape_cast %16 : vector<1x16x16xf32> to vector<16x16xf32>
    %18 = vector.shape_cast %15 : vector<16x16xf32> to vector<1x16x16xf32>
    tpu.vector_store %arg5[%c0_10, %c0_11, %c0_12], %18 {strides = array<i32>} : memref<1x16x16xf32, #tpu.memory_space<vmem>>, vector<1x16x16xf32>,
    return
  }
  func.func @transform_0(%arg0: i32, %arg1: i32) -> (i32, i32, i32) {
    %c0_i32 = arith.constant 0 : i32
    %c0_i32_0 = arith.constant 0 : i32
    return %arg0, %c0_i32, %arg1 : i32, i32, i32
  }
  func.func @transform_1(%arg0: i32, %arg1: i32) -> (i32, i32) {
    %c0_i32 = arith.constant 0 : i32
    %c0_i32_0 = arith.constant 0 : i32
    %c0_i32_1 = arith.constant 0 : i32
    return %c0_i32, %c0_i32_0 : i32, i32
  }
  func.func @transform_2(%arg0: i32, %arg1: i32) -> (i32, i32) {
    %c0_i32 = arith.constant 0 : i32
    %c0_i32_0 = arith.constant 0 : i32
    %c0_i32_1 = arith.constant 0 : i32
    return %c0_i32, %c0_i32_0 : i32, i32
  }
  func.func @transform_3(%arg0: i32, %arg1: i32) -> (i32, i32, i32) {
    %c0_i32 = arith.constant 0 : i32
    %c0_i32_0 = arith.constant 0 : i32
    return %arg0, %c0_i32, %arg1 : i32, i32, i32
  }
}

</mosaic_0001>

<llo_original>
// kernel: tpu_custom_call.1
$region0: #{tpu_custom_call.1}
  #allocation0 [shape = 'u32[]', space=smem, size = 0x4, offset = 0x4, fixed_abs, tag = 'smem constant byte address 0x4 - core index']
  #allocation1 [shape = 'u32[144,128]{1,0:T(1,128)}', space=vmem, size = 0x12000, scoped, tag = 'internal scratch']
  #allocation2 [shape = 'f32[16,32]{1,0:T(8,128)}', space=vmem, size = 0x2000, scoped, tag = 'scratch operand']
  %s0 = inlined_call_operand.hbm [shape: f32[2,32,256], index: 0, kind: input, shape index: {}]
  %s1 = inlined_call_operand.vmem [shape: f32[16,32], index: 1, kind: input, shape index: {}]
  %s2 = inlined_call_operand.vmem [shape: f32[16,1], index: 2, kind: input, shape index: {}]
  %s3 = inlined_call_operand.hbm [shape: f32[2,16,16], index: 3, kind: output, shape index: {}]
  %s4 = sld [smem:[#allocation0]]
  $region49: #{tpu_custom_call.1} parent=0
    _
  %s6 = ssub.s32 1, %s4
  %s7 = scalar_select 0, %s6, %s4
  $region1: #{tpu_custom_call.1} parent=0
    #allocation3 [shape = 'u8[65536]{0}', space=vmem, size = 0x10000, scoped, tag = 'input window, operand 0']
    #allocation4 [shape = 's32[2]{0}', space=sflag, size = 0x8, scoped, tag = 'scoped memory for tpu_custom_call.1']
    #allocation5 [shape = 's32[2]{0}', space=sflag, size = 0x8, scoped, tag = 'scoped memory for tpu_custom_call.1']
    #allocation6 [shape = 'u8[16384]{0}', space=vmem, size = 0x4000, scoped, tag = 'output window, operand 0']
    %8 = vsyncpa [#allocation4], 0
    %s9 = scalar_lea.sflag [#allocation4], 1
    %10 = vsyncpa %s9, 0
    %11 = vsyncpa [#allocation5], 0
    %s12 = scalar_lea.sflag [#allocation5], 1
    %13 = vsyncpa %s12, 0
    loop: start=0, step=1, limit=4
    $region2: #{tpu_custom_call.1} parent=1 // loop_pre_header
      _
    $region3: #{tpu_custom_call.1} parent=1 // loop_header
      %s15 = sphi 0, %s19
      %p16 = scmp.ge.s32.totalorder %s15, 4
      %s22 = sphi 0, %s34
      %s23 = sphi 0, %s30
      %s24 = sphi 0, %s22
      %s25 = sphi 0, %s23
      %s26 = sphi 0, %s24
      %s27 = sphi 0, %s25
      %s39 = sphi 0, %s41
      %s42 = sphi 0, %s39
      %s43 = sphi 0, %s42
      %s59 = sphi 0, %s43
      %s63 = sphi 0, %s63
      %s65 = sphi 0, %s63
      %s66 = sphi 0, %s65
      %s80 = sphi 0, %s66
      %s84 = sphi 0, %s84
      %s86 = sphi 0, %s84
      %s87 = sphi 0, %s86
      %s101 = sphi 0, %s87
      %s109 = sphi 0, %s111
      %s112 = sphi 0, %s109
      %s113 = sphi 0, %s112
      %s129 = sphi 0, %s113
    $region4: #{tpu_custom_call.1} parent=1 // loop_header_branch
      %18 = sbr.rel (%p16) target = $region8
    $region5: #{tpu_custom_call.1} parent=1 // loop_body
      %s20 = ssub.s32 %s15, 1
      %s21 = ssub.s32 %s15, 2
      %s28 = sadd.s32 1, %s23
      %p29 = scmp.ge.s32.totalorder %s28, 1
      %s30 = scalar_select %p29, 0, %s28
      %s31 = sadd.s32 1, %s22
      %s32 = scalar_select %p29, %s31, %s22
      %p33 = scmp.ge.s32.totalorder %s32, 2
      %s34 = scalar_select %p33, 0, %s32
      %s35 = ssub.s32 %s22, %s34
      %s36 = ssub.s32 %s23, %s30
      %s37 = sor.u32 %s35, %s36
      %p38 = scmp.eq.s32.totalorder %s37, 0
      %s40 = sadd.s32 %s39, 1
      %s41 = scalar_select %p38, %s39, %s40
      %p44 = pneg %p38
      %p45 = scmp.eq.s32.totalorder %s15, 1
      %p46 = por %p44, %p45
      %p47 = scmp.ne.s32.totalorder %s39, %s42
      %p48 = scmp.eq.s32.totalorder %s15, 0
      %p49 = por %p47, %p48
      %p50 = scmp.ne.s32.totalorder %s39, %s42
      %p51 = scmp.eq.s32.totalorder %s20, 1
      %p52 = por %p50, %p51
      %p53 = scmp.ne.s32.totalorder %s42, %s43
      %p54 = scmp.eq.s32.totalorder %s20, 0
      %p55 = por %p53, %p54
      %p56 = scmp.ne.s32.totalorder %s42, %s43
      %p57 = scmp.eq.s32.totalorder %s21, 1
      %p58 = por %p56, %p57
      %p60 = scmp.ne.s32.totalorder %s43, %s59
      %p61 = scmp.eq.s32.totalorder %s21, 0
      %p62 = por %p60, %p61
      %s64 = sadd.s32 %s63, 1
      %p67 = scmp.eq.s32.totalorder %s15, 1
      %p68 = scmp.ne.s32.totalorder %s63, %s65
      %p69 = scmp.eq.s32.totalorder %s15, 0
      %p70 = por %p68, %p69
      %p71 = scmp.ne.s32.totalorder %s63, %s65
      %p72 = scmp.eq.s32.totalorder %s20, 1
      %p73 = por %p71, %p72
      %p74 = scmp.ne.s32.totalorder %s65, %s66
      %p75 = scmp.eq.s32.totalorder %s20, 0
      %p76 = por %p74, %p75
      %p77 = scmp.ne.s32.totalorder %s65, %s66
      %p78 = scmp.eq.s32.totalorder %s21, 1
      %p79 = por %p77, %p78
      %p81 = scmp.ne.s32.totalorder %s66, %s80
      %p82 = scmp.eq.s32.totalorder %s21, 0
      %p83 = por %p81, %p82
      %s85 = sadd.s32 %s84, 1
      %p88 = scmp.eq.s32.totalorder %s15, 1
      %p89 = scmp.ne.s32.totalorder %s84, %s86
      %p90 = scmp.eq.s32.totalorder %s15, 0
      %p91 = por %p89, %p90
      %p92 = scmp.ne.s32.totalorder %s84, %s86
      %p93 = scmp.eq.s32.totalorder %s20, 1
      %p94 = por %p92, %p93
      %p95 = scmp.ne.s32.totalorder %s86, %s87
      %p96 = scmp.eq.s32.totalorder %s20, 0
      %p97 = por %p95, %p96
      %p98 = scmp.ne.s32.totalorder %s86, %s87
      %p99 = scmp.eq.s32.totalorder %s21, 1
      %p100 = por %p98, %p99
      %p102 = scmp.ne.s32.totalorder %s87, %s101
      %p103 = scmp.eq.s32.totalorder %s21, 0
      %p104 = por %p102, %p103
      %s105 = ssub.s32 %s22, %s34
      %s106 = ssub.s32 %s23, %s30
      %s107 = sor.u32 %s105, %s106
      %p108 = scmp.eq.s32.totalorder %s107, 0
      %s110 = sadd.s32 %s109, 1
      %s111 = scalar_select %p108, %s109, %s110
      %p114 = pneg %p108
      %p115 = scmp.eq.s32.totalorder %s15, 1
      %p116 = por %p114, %p115
      %p117 = scmp.ne.s32.totalorder %s109, %s112
      %p118 = scmp.eq.s32.totalorder %s15, 0
      %p119 = por %p117, %p118
      %p120 = scmp.ne.s32.totalorder %s109, %s112
      %p121 = scmp.eq.s32.totalorder %s20, 1
      %p122 = por %p120, %p121
      %p123 = scmp.ne.s32.totalorder %s112, %s113
      %p124 = scmp.eq.s32.totalorder %s20, 0
      %p125 = por %p123, %p124
      %p126 = scmp.ne.s32.totalorder %s112, %s113
      %p127 = scmp.eq.s32.totalorder %s21, 1
      %p128 = por %p126, %p127
      %p130 = scmp.ne.s32.totalorder %s113, %s129
      %p131 = scmp.eq.s32.totalorder %s21, 0
      %p132 = por %p130, %p131
      %p133 = scmp.le.s32.totalorder 1, %s15
      %p134 = scmp.lt.s32.totalorder %s15, 3
      %p135 = pnand %p133, %p134
      %p136 = pneg %p135
      // Predicated region
      $region9: #{tpu_custom_call.1} parent=5 // pred_check
        _
      $region10: #{tpu_custom_call.1} parent=5 // pred_check_branch
        %138 = sbr.rel (%p135) target = $region12
      $region11: #{tpu_custom_call.1} parent=5 // pred_region
        %s139 = ssub.s32 %s15, 1
        // Predicated region
        $region13: #{tpu_custom_call.1} parent=11 // pred_check
          %p140 = pneg %p76
        $region14: #{tpu_custom_call.1} parent=11 // pred_check_branch
          %142 = sbr.rel (%p140) target = $region16
        $region15: #{tpu_custom_call.1} parent=11 // pred_region
          _
        $region16: #{tpu_custom_call.1} parent=11 // pred_fallthru
          _
        // Predicated region
        $region17: #{tpu_custom_call.1} parent=11 // pred_check
          %p143 = pneg %p97
        $region18: #{tpu_custom_call.1} parent=11 // pred_check_branch
          %145 = sbr.rel (%p143) target = $region20
        $region19: #{tpu_custom_call.1} parent=11 // pred_region
          _
        $region20: #{tpu_custom_call.1} parent=11 // pred_fallthru
          _
      $region12: #{tpu_custom_call.1} parent=5 // pred_fallthru
        _
      %p146 = scmp.lt.s32.totalorder %s15, 2
      // Predicated region
      $region21: #{tpu_custom_call.1} parent=5 // pred_check
        %p147 = pneg %p146
      $region22: #{tpu_custom_call.1} parent=5 // pred_check_branch
        %149 = sbr.rel (%p147) target = $region24
      $region23: #{tpu_custom_call.1} parent=5 // pred_region
        // Predicated region
        $region25: #{tpu_custom_call.1} parent=23 // pred_check
          %p150 = pneg %p49
        $region26: #{tpu_custom_call.1} parent=23 // pred_check_branch
          %152 = sbr.rel (%p150) target = $region28
        $region27: #{tpu_custom_call.1} parent=23 // pred_region
          %s153 = sand.u32 %s39, 1
          %s154 = scalar_lea.sflag [#allocation4], %s153
          %s155 = sand.u32 %s39, 1
          %s156 = smul.addr %s155, 64
          %s157 = scalar_lea.vmem [#allocation3], %s156
          %s158 = smul.u32 2, %s23
          %s160 = ssub.s32 1024, 1024
          %161 = vsyncadd %s154, %s160
          %s162 = smul.addr %s22, 8
          %s163 = sadd.s32 %s158, %s162
          %s164 = smul.addr %s163, 128
          %s165 = scalar_lea.hbm %s0, %s164
          %s166 = sshll.u32 %s157, 4
          %s167 = int_to_ptr.vmem [resolvable:$true] %s166
          %172 = dma.hbm_to_vmem [thread:$0]  %s165, 1024, %s167, %s154, 256, 256, 16
        $region28: #{tpu_custom_call.1} parent=23 // pred_fallthru
          _
      $region24: #{tpu_custom_call.1} parent=5 // pred_fallthru
        _
      %p173 = scmp.le.s32.totalorder 1, %s15
      %p174 = scmp.lt.s32.totalorder %s15, 3
      %p175 = pnand %p173, %p174
      %p176 = pneg %p175
      // Predicated region
      $region29: #{tpu_custom_call.1} parent=5 // pred_check
        _
      $region30: #{tpu_custom_call.1} parent=5 // pred_check_branch
        %178 = sbr.rel (%p175) target = $region32
      $region31: #{tpu_custom_call.1} parent=5 // pred_region
        %s179 = ssub.s32 %s15, 1
        %s180 = sand.u32 %s42, 1
        %s181 = scalar_lea.sflag [#allocation4], %s180
        %s182 = sand.u32 %s42, 1
        %s183 = smul.addr %s182, 64
        %s184 = scalar_lea.vmem [#allocation3], %s183
        // Predicated region
        $region33: #{tpu_custom_call.1} parent=31 // pred_check
          %p185 = pneg %p55
        $region34: #{tpu_custom_call.1} parent=31 // pred_check_branch
          %187 = sbr.rel (%p185) target = $region36
        $region35: #{tpu_custom_call.1} parent=31 // pred_region
          %188 = dma.done %s181, 1024
        $region36: #{tpu_custom_call.1} parent=31 // pred_fallthru
          _
        %s189 = sand.u32 %s42, 1
        %s190 = scalar_lea.sflag [#allocation4], %s189
        %s191 = sand.u32 %s42, 1
        %s192 = smul.addr %s191, 64
        %s193 = scalar_lea.vmem [#allocation3], %s192
        %p194 = pneg %p55
        %p195 = pneg %p52
        %p196 = pneg %p76
        %p197 = pneg %p73
        %p198 = pneg %p97
        %p199 = pneg %p94
        %p200 = pneg %p125
        %p201 = pneg %p122
        %s202 = sand.u32 %s112, 1
        %s203 = scalar_lea.sflag [#allocation5], %s202
        %s204 = sand.u32 %s112, 1
        %s205 = smul.addr %s204, 16
        %s206 = scalar_lea.vmem [#allocation6], %s205
        %s207 = smul.u32 2, %s25
        %v208 = vld [vmem:[%s184] sm:$0xff]
        %v209 = vld [vmem:[%s184 + $0x8] sm:$0xff]
        %v210 = vld [vmem:[%s184 + $0x10] sm:$0xff]
        %v211 = vld [vmem:[%s184 + $0x18] sm:$0xff]
        %v212 = vld [vmem:[%s184 + $0x20] sm:$0xff]
        %v213 = vld [vmem:[%s184 + $0x28] sm:$0xff]
        %v214 = vld [vmem:[%s184 + $0x30] sm:$0xff]
        %v215 = vld [vmem:[%s184 + $0x38] sm:$0xff]
        %216 = vxpose.xlu0.b32.start [1/16] %v208, 128
        %217 = vxpose.xlu0.b32.cont [2/16] %v210, 128
        %218 = vxpose.xlu0.b32.cont [3/16] %v212, 128
        %219 = vxpose.xlu0.b32.cont [4/16] %v214, 128
        %220 = vxpose.xlu0.b32.cont [5/16] 0.0, 128
        %221 = vxpose.xlu0.b32.cont [6/16] 0.0, 128
        %222 = vxpose.xlu0.b32.cont [7/16] 0.0, 128
        %223 = vxpose.xlu0.b32.cont [8/16] 0.0, 128
        %224 = vxpose.xlu0.b32.cont [9/16] 0.0, 128
        %225 = vxpose.xlu0.b32.cont [10/16] 0.0, 128
        %226 = vxpose.xlu0.b32.cont [11/16] 0.0, 128
        %227 = vxpose.xlu0.b32.cont [12/16] 0.0, 128
        %228 = vxpose.xlu0.b32.cont [13/16] 0.0, 128
        %229 = vxpose.xlu0.b32.cont [14/16] 0.0, 128
        %230 = vxpose.xlu0.b32.cont [15/16] 0.0, 128
        %231 = vxpose.xlu0.b32.end [16/16] 0.0, 128
        %v232 = vpop.trf.xlu0
        %v233 = vpop.trf.xlu0
        %v234 = vpop.trf.xlu0
        %v235 = vpop.trf.xlu0
        %v236 = vpop.trf.xlu0
        %v237 = vpop.trf.xlu0
        %v238 = vpop.trf.xlu0
        %v239 = vpop.trf.xlu0
        %v240 = vpop.trf.xlu0
        %v241 = vpop.trf.xlu0
        %v242 = vpop.trf.xlu0
        %v243 = vpop.trf.xlu0
        %v244 = vpop.trf.xlu0
        %v245 = vpop.trf.xlu0
        %v246 = vpop.trf.xlu0
        %v247 = vpop.trf.xlu0
        %248 = vxpose.xlu0.b32.start [1/16] %v209, 128
        %249 = vxpose.xlu0.b32.cont [2/16] %v211, 128
        %250 = vxpose.xlu0.b32.cont [3/16] %v213, 128
        %251 = vxpose.xlu0.b32.cont [4/16] %v215, 128
        %252 = vxpose.xlu0.b32.cont [5/16] 0.0, 128
        %253 = vxpose.xlu0.b32.cont [6/16] 0.0, 128
        %254 = vxpose.xlu0.b32.cont [7/16] 0.0, 128
        %255 = vxpose.xlu0.b32.cont [8/16] 0.0, 128
        %256 = vxpose.xlu0.b32.cont [9/16] 0.0, 128
        %257 = vxpose.xlu0.b32.cont [10/16] 0.0, 128
        %258 = vxpose.xlu0.b32.cont [11/16] 0.0, 128
        %259 = vxpose.xlu0.b32.cont [12/16] 0.0, 128
        %260 = vxpose.xlu0.b32.cont [13/16] 0.0, 128
        %261 = vxpose.xlu0.b32.cont [14/16] 0.0, 128
        %262 = vxpose.xlu0.b32.cont [15/16] 0.0, 128
        %263 = vxpose.xlu0.b32.end [16/16] 0.0, 128
        %v264 = vpop.trf.xlu0
        %v265 = vpop.trf.xlu0
        %v266 = vpop.trf.xlu0
        %v267 = vpop.trf.xlu0
        %v268 = vpop.trf.xlu0
        %v269 = vpop.trf.xlu0
        %v270 = vpop.trf.xlu0
        %v271 = vpop.trf.xlu0
        %v272 = vpop.trf.xlu0
        %v273 = vpop.trf.xlu0
        %v274 = vpop.trf.xlu0
        %v275 = vpop.trf.xlu0
        %v276 = vpop.trf.xlu0
        %v277 = vpop.trf.xlu0
        %v278 = vpop.trf.xlu0
        %v279 = vpop.trf.xlu0
        %vm280 = vcmask 261120
        %v281 = vsel %vm280, %v232, -inf
        %v282 = vsel %vm280, %v233, -inf
        %v283 = vmax.f32 %v281, %v282
        %v284 = vrot.slane %v283, 4
        %v285 = vmax.f32 %v283, %v284
        %v286 = vrot.slane %v285, 2
        %v287 = vmax.f32 %v285, %v286
        %v288 = vrot.slane %v287, 1
        %v289 = vmax.f32 %v287, %v288
        %v290 = vsel %vm280, %v234, -inf
        %v291 = vsel %vm280, %v235, -inf
        %v292 = vmax.f32 %v290, %v291
        %v293 = vrot.slane %v292, 4
        %v294 = vmax.f32 %v292, %v293
        %v295 = vrot.slane %v294, 2
        %v296 = vmax.f32 %v294, %v295
        %v297 = vrot.slane %v296, 1
        %v298 = vmax.f32 %v296, %v297
        %v299 = vsel %vm280, %v236, -inf
        %v300 = vsel %vm280, %v237, -inf
        %v301 = vmax.f32 %v299, %v300
        %v302 = vrot.slane %v301, 4
        %v303 = vmax.f32 %v301, %v302
        %v304 = vrot.slane %v303, 2
        %v305 = vmax.f32 %v303, %v304
        %v306 = vrot.slane %v305, 1
        %v307 = vmax.f32 %v305, %v306
        %v308 = vsel %vm280, %v238, -inf
        %v309 = vsel %vm280, %v239, -inf
        %v310 = vmax.f32 %v308, %v309
        %v311 = vrot.slane %v310, 4
        %v312 = vmax.f32 %v310, %v311
        %v313 = vrot.slane %v312, 2
        %v314 = vmax.f32 %v312, %v313
        %v315 = vrot.slane %v314, 1
        %v316 = vmax.f32 %v314, %v315
        %v317 = vsel %vm280, %v240, -inf
        %v318 = vsel %vm280, %v241, -inf
        %v319 = vmax.f32 %v317, %v318
        %v320 = vrot.slane %v319, 4
        %v321 = vmax.f32 %v319, %v320
        %v322 = vrot.slane %v321, 2
        %v323 = vmax.f32 %v321, %v322
        %v324 = vrot.slane %v323, 1
        %v325 = vmax.f32 %v323, %v324
        %v326 = vsel %vm280, %v242, -inf
        %v327 = vsel %vm280, %v243, -inf
        %v328 = vmax.f32 %v326, %v327
        %v329 = vrot.slane %v328, 4
        %v330 = vmax.f32 %v328, %v329
        %v331 = vrot.slane %v330, 2
        %v332 = vmax.f32 %v330, %v331
        %v333 = vrot.slane %v332, 1
        %v334 = vmax.f32 %v332, %v333
        %v335 = vsel %vm280, %v244, -inf
        %v336 = vsel %vm280, %v245, -inf
        %v337 = vmax.f32 %v335, %v336
        %v338 = vrot.slane %v337, 4
        %v339 = vmax.f32 %v337, %v338
        %v340 = vrot.slane %v339, 2
        %v341 = vmax.f32 %v339, %v340
        %v342 = vrot.slane %v341, 1
        %v343 = vmax.f32 %v341, %v342
        %v344 = vsel %vm280, %v246, -inf
        %v345 = vsel %vm280, %v247, -inf
        %v346 = vmax.f32 %v344, %v345
        %v347 = vrot.slane %v346, 4
        %v348 = vmax.f32 %v346, %v347
        %v349 = vrot.slane %v348, 2
        %v350 = vmax.f32 %v348, %v349
        %v351 = vrot.slane %v350, 1
        %v352 = vmax.f32 %v350, %v351
        %v353 = vsel %vm280, %v264, -inf
        %v354 = vsel %vm280, %v265, -inf
        %v355 = vmax.f32 %v353, %v354
        %v356 = vrot.slane %v355, 4
        %v357 = vmax.f32 %v355, %v356
        %v358 = vrot.slane %v357, 2
        %v359 = vmax.f32 %v357, %v358
        %v360 = vrot.slane %v359, 1
        %v361 = vmax.f32 %v359, %v360
        %v362 = vsel %vm280, %v266, -inf
        %v363 = vsel %vm280, %v267, -inf
        %v364 = vmax.f32 %v362, %v363
        %v365 = vrot.slane %v364, 4
        %v366 = vmax.f32 %v364, %v365
        %v367 = vrot.slane %v366, 2
        %v368 = vmax.f32 %v366, %v367
        %v369 = vrot.slane %v368, 1
        %v370 = vmax.f32 %v368, %v369
        %v371 = vsel %vm280, %v268, -inf
        %v372 = vsel %vm280, %v269, -inf
        %v373 = vmax.f32 %v371, %v372
        %v374 = vrot.slane %v373, 4
        %v375 = vmax.f32 %v373, %v374
        %v376 = vrot.slane %v375, 2
        %v377 = vmax.f32 %v375, %v376
        %v378 = vrot.slane %v377, 1
        %v379 = vmax.f32 %v377, %v378
        %v380 = vsel %vm280, %v270, -inf
        %v381 = vsel %vm280, %v271, -inf
        %v382 = vmax.f32 %v380, %v381
        %v383 = vrot.slane %v382, 4
        %v384 = vmax.f32 %v382, %v383
        %v385 = vrot.slane %v384, 2
        %v386 = vmax.f32 %v384, %v385
        %v387 = vrot.slane %v386, 1
        %v388 = vmax.f32 %v386, %v387
        %v389 = vsel %vm280, %v272, -inf
        %v390 = vsel %vm280, %v273, -inf
        %v391 = vmax.f32 %v389, %v390
        %v392 = vrot.slane %v391, 4
        %v393 = vmax.f32 %v391, %v392
        %v394 = vrot.slane %v393, 2
        %v395 = vmax.f32 %v393, %v394
        %v396 = vrot.slane %v395, 1
        %v397 = vmax.f32 %v395, %v396
        %v398 = vsel %vm280, %v274, -inf
        %v399 = vsel %vm280, %v275, -inf
        %v400 = vmax.f32 %v398, %v399
        %v401 = vrot.slane %v400, 4
        %v402 = vmax.f32 %v400, %v401
        %v403 = vrot.slane %v402, 2
        %v404 = vmax.f32 %v402, %v403
        %v405 = vrot.slane %v404, 1
        %v406 = vmax.f32 %v404, %v405
        %v407 = vsel %vm280, %v276, -inf
        %v408 = vsel %vm280, %v277, -inf
        %v409 = vmax.f32 %v407, %v408
        %v410 = vrot.slane %v409, 4
        %v411 = vmax.f32 %v409, %v410
        %v412 = vrot.slane %v411, 2
        %v413 = vmax.f32 %v411, %v412
        %v414 = vrot.slane %v413, 1
        %v415 = vmax.f32 %v413, %v414
        %v416 = vsel %vm280, %v278, -inf
        %v417 = vsel %vm280, %v279, -inf
        %v418 = vmax.f32 %v416, %v417
        %v419 = vrot.slane %v418, 4
        %v420 = vmax.f32 %v418, %v419
        %v421 = vrot.slane %v420, 2
        %v422 = vmax.f32 %v420, %v421
        %v423 = vrot.slane %v422, 1
        %v424 = vmax.f32 %v422, %v423
        %vm441 = vcmask 1041409
        %v442 = vsel %vm441, %v298, %v289
        %vm443 = vcmask 1042434
        %v444 = vsel %vm443, %v307, %v442
        %vm445 = vcmask 1043459
        %v446 = vsel %vm445, %v316, %v444
        %vm447 = vcmask 1044484
        %v448 = vsel %vm447, %v325, %v446
        %vm449 = vcmask 1045509
        %v450 = vsel %vm449, %v334, %v448
        %vm451 = vcmask 1046534
        %v452 = vsel %vm451, %v343, %v450
        %vm453 = vcmask 1047559
        %v454 = vsel %vm453, %v352, %v452
        %v455 = vsel %vm441, %v370, %v361
        %v456 = vsel %vm443, %v379, %v455
        %v457 = vsel %vm445, %v388, %v456
        %v458 = vsel %vm447, %v397, %v457
        %v459 = vsel %vm449, %v406, %v458
        %v460 = vsel %vm451, %v415, %v459
        %v461 = vsel %vm453, %v424, %v460
        %464 = vst.msk [vmem:[#allocation2] sm:$0xff] %vm280, %v454
        %465 = vst.msk [vmem:[#allocation2 + $0x8] sm:$0xff] %vm280, %v461
        %v466 = vld [vmem:[%s1] sm:$0xff]
        %v467 = vld [vmem:[%s1 + $0x8] sm:$0xff]
        %v468 = vld [vmem:[#allocation2] sm:$0xff]
        %v469 = vld [vmem:[#allocation2 + $0x8] sm:$0xff]
        %v470 = vld [vmem:[%s2] sm:$0xff]
        %v471 = vld [vmem:[%s2 + $0x8] sm:$0xff]
        %473 = vset.pattern.permute.xlu0 0
        %474 = vperm.xlu0 %473, %v470
        %v475 = vpop.permute.xlu0 %474
        %478 = vset.pattern.permute.xlu0 0
        %479 = vperm.xlu0 %478, %v471
        %v480 = vpop.permute.xlu0 %479
        %v483 = vsel %vm280, %v466, 0
        %v486 = vsel %vm280, %v467, 0
        %v489 = vsel %vm280, %v468, 0
        %v492 = vsel %vm280, %v469, 0
        %494 = vmatprep.subr.mxu0 0.0
        %v495 = vand.u32 %v489, 4294901760
        %496 = vmatpush1.xpose.msra.mxu0 %v495
        %497 = vmatprep.subr.mxu0 0.0
        %v498 = vand.u32 %v492, 4294901760
        %499 = vmatpush1.xpose.msra.mxu0 %v498
        %500 = vmatprep.subr.mxu0 0.0
        %501 = vmatpush1.xpose.msra.mxu0 0.0
        %502 = vmatprep.subr.mxu0 0.0
        %503 = vmatpush1.xpose.msra.mxu0 0.0
        %504 = vmatprep.subr.mxu0 0.0
        %505 = vmatpush1.xpose.msra.mxu0 0.0
        %506 = vmatprep.subr.mxu0 0.0
        %507 = vmatpush1.xpose.msra.mxu0 0.0
        %508 = vmatprep.subr.mxu0 0.0
        %509 = vmatpush1.xpose.msra.mxu0 0.0
        %510 = vmatprep.subr.mxu0 0.0
        %511 = vmatpush1.xpose.msra.mxu0 0.0
        %512 = vmatprep.subr.mxu0 0.0
        %513 = vmatpush1.xpose.msra.mxu0 0.0
        %514 = vmatprep.subr.mxu0 0.0
        %515 = vmatpush1.xpose.msra.mxu0 0.0
        %516 = vmatprep.subr.mxu0 0.0
        %517 = vmatpush1.xpose.msra.mxu0 0.0
        %518 = vmatprep.subr.mxu0 0.0
        %519 = vmatpush1.xpose.msra.mxu0 0.0
        %520 = vmatprep.subr.mxu0 0.0
        %521 = vmatpush1.xpose.msra.mxu0 0.0
        %522 = vmatprep.subr.mxu0 0.0
        %523 = vmatpush1.xpose.msra.mxu0 0.0
        %524 = vmatprep.subr.mxu0 0.0
        %525 = vmatpush1.xpose.msra.mxu0 0.0
        %526 = vmatprep.subr.mxu0 0.0
        %527 = vmatpush1.xpose.msra.mxu0 0.0
        %528 = vmatprep.subr.mxu0 0.0
        %529 = vmatpush1.xpose.msra.mxu0 0.0
        %530 = vmatprep.subr.mxu0 0.0
        %531 = vmatpush1.xpose.msra.mxu0 0.0
        %532 = vmatprep.subr.mxu0 0.0
        %533 = vmatpush1.xpose.msra.mxu0 0.0
        %534 = vmatprep.subr.mxu0 0.0
        %535 = vmatpush1.xpose.msra.mxu0 0.0
        %536 = vmatprep.subr.mxu0 0.0
        %537 = vmatpush1.xpose.msra.mxu0 0.0
        %538 = vmatprep.subr.mxu0 0.0
        %539 = vmatpush1.xpose.msra.mxu0 0.0
        %540 = vmatprep.subr.mxu0 0.0
        %541 = vmatpush1.xpose.msra.mxu0 0.0
        %542 = vmatprep.subr.mxu0 0.0
        %543 = vmatpush1.xpose.msra.mxu0 0.0
        %544 = vmatprep.subr.mxu0 0.0
        %545 = vmatpush1.xpose.msra.mxu0 0.0
        %546 = vmatprep.subr.mxu0 0.0
        %547 = vmatpush1.xpose.msra.mxu0 0.0
        %548 = vmatprep.subr.mxu0 0.0
        %549 = vmatpush1.xpose.msra.mxu0 0.0
        %550 = vmatprep.subr.mxu0 0.0
        %551 = vmatpush1.xpose.msra.mxu0 0.0
        %552 = vmatprep.subr.mxu0 0.0
        %553 = vmatpush1.xpose.msra.mxu0 0.0
        %554 = vmatprep.subr.mxu0 0.0
        %555 = vmatpush1.xpose.msra.mxu0 0.0
        %556 = vmatprep.subr.mxu0 0.0
        %557 = vmatpush1.xpose.msra.mxu0 0.0
        %558 = vmatprep.subr.mxu0 0.0
        %559 = vmatpush1.xpose.msra.mxu0 0.0
        %560 = vmatprep.mubr.f32.mxu0 0.0
        %v561 = vand.u32 %v483, 4294901760
        %v562 = vsub.f32 %v483, %v561
        %v563 = vand.u32 %v562, 4294901760
        %v564 = vsub.f32 %v562, %v563
        %v565 = vand.u32 %v564, 4294901760
        %566 = vmatmul.mubr.f32.gmra.mrb[0].mxu0 %v565
        %v567 = vpop.f32.mrb[0].mxu0
        %v568 = vadd.f32 %v475, %v567
        %v569 = vpop.f32.mrb[0].mxu0
        %570 = vmatprep.mubr.f32.mxu0 0.0
        %v571 = vand.u32 %v486, 4294901760
        %v572 = vsub.f32 %v486, %v571
        %v573 = vand.u32 %v572, 4294901760
        %v574 = vsub.f32 %v572, %v573
        %v575 = vand.u32 %v574, 4294901760
        %576 = vmatmul.mubr.f32.gmra.mrb[0].mxu0 %v575
        %v577 = vpop.f32.mrb[0].mxu0
        %v578 = vadd.f32 %v480, %v577
        %v579 = vpop.f32.mrb[0].mxu0
        %580 = vdwg.mxu0
        %581 = vmatprep.subr.mxu0 0.0
        %v582 = vand.u32 %v489, 4294901760
        %v583 = vsub.f32 %v489, %v582
        %v584 = vand.u32 %v583, 4294901760
        %v585 = vsub.f32 %v583, %v584
        %v586 = vand.u32 %v585, 4294901760
        %587 = vmatpush1.xpose.msra.mxu0 %v586
        %588 = vmatprep.subr.mxu0 0.0
        %v589 = vand.u32 %v492, 4294901760
        %v590 = vsub.f32 %v492, %v589
        %v591 = vand.u32 %v590, 4294901760
        %v592 = vsub.f32 %v590, %v591
        %v593 = vand.u32 %v592, 4294901760
        %594 = vmatpush1.xpose.msra.mxu0 %v593
        %595 = vmatprep.subr.mxu0 0.0
        %596 = vmatpush1.xpose.msra.mxu0 0.0
        %597 = vmatprep.subr.mxu0 0.0
        %598 = vmatpush1.xpose.msra.mxu0 0.0
        %599 = vmatprep.subr.mxu0 0.0
        %600 = vmatpush1.xpose.msra.mxu0 0.0
        %601 = vmatprep.subr.mxu0 0.0
        %602 = vmatpush1.xpose.msra.mxu0 0.0
        %603 = vmatprep.subr.mxu0 0.0
        %604 = vmatpush1.xpose.msra.mxu0 0.0
        %605 = vmatprep.subr.mxu0 0.0
        %606 = vmatpush1.xpose.msra.mxu0 0.0
        %607 = vmatprep.subr.mxu0 0.0
        %608 = vmatpush1.xpose.msra.mxu0 0.0
        %609 = vmatprep.subr.mxu0 0.0
        %610 = vmatpush1.xpose.msra.mxu0 0.0
        %611 = vmatprep.subr.mxu0 0.0
        %612 = vmatpush1.xpose.msra.mxu0 0.0
        %613 = vmatprep.subr.mxu0 0.0
        %614 = vmatpush1.xpose.msra.mxu0 0.0
        %615 = vmatprep.subr.mxu0 0.0
        %616 = vmatpush1.xpose.msra.mxu0 0.0
        %617 = vmatprep.subr.mxu0 0.0
        %618 = vmatpush1.xpose.msra.mxu0 0.0
        %619 = vmatprep.subr.mxu0 0.0
        %620 = vmatpush1.xpose.msra.mxu0 0.0
        %621 = vmatprep.subr.mxu0 0.0
        %622 = vmatpush1.xpose.msra.mxu0 0.0
        %623 = vmatprep.subr.mxu0 0.0
        %624 = vmatpush1.xpose.msra.mxu0 0.0
        %625 = vmatprep.subr.mxu0 0.0
        %626 = vmatpush1.xpose.msra.mxu0 0.0
        %627 = vmatprep.subr.mxu0 0.0
        %628 = vmatpush1.xpose.msra.mxu0 0.0
        %629 = vmatprep.subr.mxu0 0.0
        %630 = vmatpush1.xpose.msra.mxu0 0.0
        %631 = vmatprep.subr.mxu0 0.0
        %632 = vmatpush1.xpose.msra.mxu0 0.0
        %633 = vmatprep.subr.mxu0 0.0
        %634 = vmatpush1.xpose.msra.mxu0 0.0
        %635 = vmatprep.subr.mxu0 0.0
        %636 = vmatpush1.xpose.msra.mxu0 0.0
        %637 = vmatprep.subr.mxu0 0.0
        %638 = vmatpush1.xpose.msra.mxu0 0.0
        %639 = vmatprep.subr.mxu0 0.0
        %640 = vmatpush1.xpose.msra.mxu0 0.0
        %641 = vmatprep.subr.mxu0 0.0
        %642 = vmatpush1.xpose.msra.mxu0 0.0
        %643 = vmatprep.subr.mxu0 0.0
        %644 = vmatpush1.xpose.msra.mxu0 0.0
        %645 = vmatprep.subr.mxu0 0.0
        %646 = vmatpush1.xpose.msra.mxu0 0.0
        %647 = vmatprep.subr.mxu0 0.0
        %648 = vmatpush1.xpose.msra.mxu0 0.0
        %649 = vmatprep.subr.mxu0 0.0
        %650 = vmatpush1.xpose.msra.mxu0 0.0
        %651 = vmatprep.subr.mxu0 0.0
        %652 = vmatpush1.xpose.msra.mxu0 0.0
        %653 = vmatprep.subr.mxu0 0.0
        %654 = vmatpush1.xpose.msra.mxu0 0.0
        %655 = vmatprep.mubr.f32.mxu0 0.0
        %v656 = vand.u32 %v483, 4294901760
        %657 = vmatmul.mubr.f32.gmra.mrb[0].mxu0 %v656
        %v658 = vpop.f32.mrb[0].mxu0
        %v659 = vadd.f32 %v568, %v658
        %v660 = vpop.f32.mrb[0].mxu0
        %661 = vmatprep.mubr.f32.mxu0 0.0
        %v662 = vand.u32 %v486, 4294901760
        %663 = vmatmul.mubr.f32.gmra.mrb[0].mxu0 %v662
        %v664 = vpop.f32.mrb[0].mxu0
        %v665 = vadd.f32 %v578, %v664
        %v666 = vpop.f32.mrb[0].mxu0
        %667 = vdwg.mxu0
        %668 = vmatprep.subr.mxu0 0.0
        %v669 = vand.u32 %v489, 4294901760
        %v670 = vsub.f32 %v489, %v669
        %671 = vmatpush1.xpose.msra.mxu0 %v670
        %672 = vmatprep.subr.mxu0 0.0
        %v673 = vand.u32 %v492, 4294901760
        %v674 = vsub.f32 %v492, %v673
        %675 = vmatpush1.xpose.msra.mxu0 %v674
        %676 = vmatprep.subr.mxu0 0.0
        %677 = vmatpush1.xpose.msra.mxu0 0.0
        %678 = vmatprep.subr.mxu0 0.0
        %679 = vmatpush1.xpose.msra.mxu0 0.0
        %680 = vmatprep.subr.mxu0 0.0
        %681 = vmatpush1.xpose.msra.mxu0 0.0
        %682 = vmatprep.subr.mxu0 0.0
        %683 = vmatpush1.xpose.msra.mxu0 0.0
        %684 = vmatprep.subr.mxu0 0.0
        %685 = vmatpush1.xpose.msra.mxu0 0.0
        %686 = vmatprep.subr.mxu0 0.0
        %687 = vmatpush1.xpose.msra.mxu0 0.0
        %688 = vmatprep.subr.mxu0 0.0
        %689 = vmatpush1.xpose.msra.mxu0 0.0
        %690 = vmatprep.subr.mxu0 0.0
        %691 = vmatpush1.xpose.msra.mxu0 0.0
        %692 = vmatprep.subr.mxu0 0.0
        %693 = vmatpush1.xpose.msra.mxu0 0.0
        %694 = vmatprep.subr.mxu0 0.0
        %695 = vmatpush1.xpose.msra.mxu0 0.0
        %696 = vmatprep.subr.mxu0 0.0
        %697 = vmatpush1.xpose.msra.mxu0 0.0
        %698 = vmatprep.subr.mxu0 0.0
        %699 = vmatpush1.xpose.msra.mxu0 0.0
        %700 = vmatprep.subr.mxu0 0.0
        %701 = vmatpush1.xpose.msra.mxu0 0.0
        %702 = vmatprep.subr.mxu0 0.0
        %703 = vmatpush1.xpose.msra.mxu0 0.0
        %704 = vmatprep.subr.mxu0 0.0
        %705 = vmatpush1.xpose.msra.mxu0 0.0
        %706 = vmatprep.subr.mxu0 0.0
        %707 = vmatpush1.xpose.msra.mxu0 0.0
        %708 = vmatprep.subr.mxu0 0.0
        %709 = vmatpush1.xpose.msra.mxu0 0.0
        %710 = vmatprep.subr.mxu0 0.0
        %711 = vmatpush1.xpose.msra.mxu0 0.0
        %712 = vmatprep.subr.mxu0 0.0
        %713 = vmatpush1.xpose.msra.mxu0 0.0
        %714 = vmatprep.subr.mxu0 0.0
        %715 = vmatpush1.xpose.msra.mxu0 0.0
        %716 = vmatprep.subr.mxu0 0.0
        %717 = vmatpush1.xpose.msra.mxu0 0.0
        %718 = vmatprep.subr.mxu0 0.0
        %719 = vmatpush1.xpose.msra.mxu0 0.0
        %720 = vmatprep.subr.mxu0 0.0
        %721 = vmatpush1.xpose.msra.mxu0 0.0
        %722 = vmatprep.subr.mxu0 0.0
        %723 = vmatpush1.xpose.msra.mxu0 0.0
        %724 = vmatprep.subr.mxu0 0.0
        %725 = vmatpush1.xpose.msra.mxu0 0.0
        %726 = vmatprep.subr.mxu0 0.0
        %727 = vmatpush1.xpose.msra.mxu0 0.0
        %728 = vmatprep.subr.mxu0 0.0
        %729 = vmatpush1.xpose.msra.mxu0 0.0
        %730 = vmatprep.subr.mxu0 0.0
        %731 = vmatpush1.xpose.msra.mxu0 0.0
        %732 = vmatprep.subr.mxu0 0.0
        %733 = vmatpush1.xpose.msra.mxu0 0.0
        %734 = vmatprep.subr.mxu0 0.0
        %735 = vmatpush1.xpose.msra.mxu0 0.0
        %736 = vmatprep.mubr.f32.mxu0 0.0
        %v737 = vand.u32 %v483, 4294901760
        %v738 = vsub.f32 %v483, %v737
        %739 = vmatmul.mubr.f32.gmra.mrb[0].mxu0 %v738
        %v740 = vpop.f32.mrb[0].mxu0
        %v741 = vadd.f32 %v659, %v740
        %v742 = vpop.f32.mrb[0].mxu0
        %743 = vmatprep.mubr.f32.mxu0 0.0
        %v744 = vand.u32 %v486, 4294901760
        %v745 = vsub.f32 %v486, %v744
        %746 = vmatmul.mubr.f32.gmra.mrb[0].mxu0 %v745
        %v747 = vpop.f32.mrb[0].mxu0
        %v748 = vadd.f32 %v665, %v747
        %v749 = vpop.f32.mrb[0].mxu0
        %750 = vdwg.mxu0
        %751 = vmatprep.subr.mxu0 0.0
        %v752 = vand.u32 %v489, 4294901760
        %753 = vmatpush1.xpose.msra.mxu0 %v752
        %754 = vmatprep.subr.mxu0 0.0
        %v755 = vand.u32 %v492, 4294901760
        %756 = vmatpush1.xpose.msra.mxu0 %v755
        %757 = vmatprep.subr.mxu0 0.0
        %758 = vmatpush1.xpose.msra.mxu0 0.0
        %759 = vmatprep.subr.mxu0 0.0
        %760 = vmatpush1.xpose.msra.mxu0 0.0
        %761 = vmatprep.subr.mxu0 0.0
        %762 = vmatpush1.xpose.msra.mxu0 0.0
        %763 = vmatprep.subr.mxu0 0.0
        %764 = vmatpush1.xpose.msra.mxu0 0.0
        %765 = vmatprep.subr.mxu0 0.0
        %766 = vmatpush1.xpose.msra.mxu0 0.0
        %767 = vmatprep.subr.mxu0 0.0
        %768 = vmatpush1.xpose.msra.mxu0 0.0
        %769 = vmatprep.subr.mxu0 0.0
        %770 = vmatpush1.xpose.msra.mxu0 0.0
        %771 = vmatprep.subr.mxu0 0.0
        %772 = vmatpush1.xpose.msra.mxu0 0.0
        %773 = vmatprep.subr.mxu0 0.0
        %774 = vmatpush1.xpose.msra.mxu0 0.0
        %775 = vmatprep.subr.mxu0 0.0
        %776 = vmatpush1.xpose.msra.mxu0 0.0
        %777 = vmatprep.subr.mxu0 0.0
        %778 = vmatpush1.xpose.msra.mxu0 0.0
        %779 = vmatprep.subr.mxu0 0.0
        %780 = vmatpush1.xpose.msra.mxu0 0.0
        %781 = vmatprep.subr.mxu0 0.0
        %782 = vmatpush1.xpose.msra.mxu0 0.0
        %783 = vmatprep.subr.mxu0 0.0
        %784 = vmatpush1.xpose.msra.mxu0 0.0
        %785 = vmatprep.subr.mxu0 0.0
        %786 = vmatpush1.xpose.msra.mxu0 0.0
        %787 = vmatprep.subr.mxu0 0.0
        %788 = vmatpush1.xpose.msra.mxu0 0.0
        %789 = vmatprep.subr.mxu0 0.0
        %790 = vmatpush1.xpose.msra.mxu0 0.0
        %791 = vmatprep.subr.mxu0 0.0
        %792 = vmatpush1.xpose.msra.mxu0 0.0
        %793 = vmatprep.subr.mxu0 0.0
        %794 = vmatpush1.xpose.msra.mxu0 0.0
        %795 = vmatprep.subr.mxu0 0.0
        %796 = vmatpush1.xpose.msra.mxu0 0.0
        %797 = vmatprep.subr.mxu0 0.0
        %798 = vmatpush1.xpose.msra.mxu0 0.0
        %799 = vmatprep.subr.mxu0 0.0
        %800 = vmatpush1.xpose.msra.mxu0 0.0
        %801 = vmatprep.subr.mxu0 0.0
        %802 = vmatpush1.xpose.msra.mxu0 0.0
        %803 = vmatprep.subr.mxu0 0.0
        %804 = vmatpush1.xpose.msra.mxu0 0.0
        %805 = vmatprep.subr.mxu0 0.0
        %806 = vmatpush1.xpose.msra.mxu0 0.0
        %807 = vmatprep.subr.mxu0 0.0
        %808 = vmatpush1.xpose.msra.mxu0 0.0
        %809 = vmatprep.subr.mxu0 0.0
        %810 = vmatpush1.xpose.msra.mxu0 0.0
        %811 = vmatprep.subr.mxu0 0.0
        %812 = vmatpush1.xpose.msra.mxu0 0.0
        %813 = vmatprep.subr.mxu0 0.0
        %814 = vmatpush1.xpose.msra.mxu0 0.0
        %815 = vmatprep.subr.mxu0 0.0
        %816 = vmatpush1.xpose.msra.mxu0 0.0
        %817 = vmatprep.mubr.f32.mxu0 0.0
        %v818 = vand.u32 %v483, 4294901760
        %v819 = vsub.f32 %v483, %v818
        %v820 = vand.u32 %v819, 4294901760
        %821 = vmatmul.mubr.f32.gmra.mrb[0].mxu0 %v820
        %v822 = vpop.f32.mrb[0].mxu0
        %v823 = vadd.f32 %v741, %v822
        %v824 = vpop.f32.mrb[0].mxu0
        %825 = vmatprep.mubr.f32.mxu0 0.0
        %v826 = vand.u32 %v486, 4294901760
        %v827 = vsub.f32 %v486, %v826
        %v828 = vand.u32 %v827, 4294901760
        %829 = vmatmul.mubr.f32.gmra.mrb[0].mxu0 %v828
        %v830 = vpop.f32.mrb[0].mxu0
        %v831 = vadd.f32 %v748, %v830
        %v832 = vpop.f32.mrb[0].mxu0
        %833 = vdwg.mxu0
        %834 = vmatprep.subr.mxu0 0.0
        %v835 = vand.u32 %v489, 4294901760
        %v836 = vsub.f32 %v489, %v835
        %v837 = vand.u32 %v836, 4294901760
        %838 = vmatpush1.xpose.msra.mxu0 %v837
        %839 = vmatprep.subr.mxu0 0.0
        %v840 = vand.u32 %v492, 4294901760
        %v841 = vsub.f32 %v492, %v840
        %v842 = vand.u32 %v841, 4294901760
        %843 = vmatpush1.xpose.msra.mxu0 %v842
        %844 = vmatprep.subr.mxu0 0.0
        %845 = vmatpush1.xpose.msra.mxu0 0.0
        %846 = vmatprep.subr.mxu0 0.0
        %847 = vmatpush1.xpose.msra.mxu0 0.0
        %848 = vmatprep.subr.mxu0 0.0
        %849 = vmatpush1.xpose.msra.mxu0 0.0
        %850 = vmatprep.subr.mxu0 0.0
        %851 = vmatpush1.xpose.msra.mxu0 0.0
        %852 = vmatprep.subr.mxu0 0.0
        %853 = vmatpush1.xpose.msra.mxu0 0.0
        %854 = vmatprep.subr.mxu0 0.0
        %855 = vmatpush1.xpose.msra.mxu0 0.0
        %856 = vmatprep.subr.mxu0 0.0
        %857 = vmatpush1.xpose.msra.mxu0 0.0
        %858 = vmatprep.subr.mxu0 0.0
        %859 = vmatpush1.xpose.msra.mxu0 0.0
        %860 = vmatprep.subr.mxu0 0.0
        %861 = vmatpush1.xpose.msra.mxu0 0.0
        %862 = vmatprep.subr.mxu0 0.0
        %863 = vmatpush1.xpose.msra.mxu0 0.0
        %864 = vmatprep.subr.mxu0 0.0
        %865 = vmatpush1.xpose.msra.mxu0 0.0
        %866 = vmatprep.subr.mxu0 0.0
        %867 = vmatpush1.xpose.msra.mxu0 0.0
        %868 = vmatprep.subr.mxu0 0.0
        %869 = vmatpush1.xpose.msra.mxu0 0.0
        %870 = vmatprep.subr.mxu0 0.0
        %871 = vmatpush1.xpose.msra.mxu0 0.0
        %872 = vmatprep.subr.mxu0 0.0
        %873 = vmatpush1.xpose.msra.mxu0 0.0
        %874 = vmatprep.subr.mxu0 0.0
        %875 = vmatpush1.xpose.msra.mxu0 0.0
        %876 = vmatprep.subr.mxu0 0.0
        %877 = vmatpush1.xpose.msra.mxu0 0.0
        %878 = vmatprep.subr.mxu0 0.0
        %879 = vmatpush1.xpose.msra.mxu0 0.0
        %880 = vmatprep.subr.mxu0 0.0
        %881 = vmatpush1.xpose.msra.mxu0 0.0
        %882 = vmatprep.subr.mxu0 0.0
        %883 = vmatpush1.xpose.msra.mxu0 0.0
        %884 = vmatprep.subr.mxu0 0.0
        %885 = vmatpush1.xpose.msra.mxu0 0.0
        %886 = vmatprep.subr.mxu0 0.0
        %887 = vmatpush1.xpose.msra.mxu0 0.0
        %888 = vmatprep.subr.mxu0 0.0
        %889 = vmatpush1.xpose.msra.mxu0 0.0
        %890 = vmatprep.subr.mxu0 0.0
        %891 = vmatpush1.xpose.msra.mxu0 0.0
        %892 = vmatprep.subr.mxu0 0.0
        %893 = vmatpush1.xpose.msra.mxu0 0.0
        %894 = vmatprep.subr.mxu0 0.0
        %895 = vmatpush1.xpose.msra.mxu0 0.0
        %896 = vmatprep.subr.mxu0 0.0
        %897 = vmatpush1.xpose.msra.mxu0 0.0
        %898 = vmatprep.subr.mxu0 0.0
        %899 = vmatpush1.xpose.msra.mxu0 0.0
        %900 = vmatprep.subr.mxu0 0.0
        %901 = vmatpush1.xpose.msra.mxu0 0.0
        %902 = vmatprep.subr.mxu0 0.0
        %903 = vmatpush1.xpose.msra.mxu0 0.0
        %904 = vmatprep.mubr.f32.mxu0 0.0
        %v905 = vand.u32 %v483, 4294901760
        %906 = vmatmul.mubr.f32.gmra.mrb[0].mxu0 %v905
        %v907 = vpop.f32.mrb[0].mxu0
        %v908 = vadd.f32 %v823, %v907
        %v909 = vpop.f32.mrb[0].mxu0
        %910 = vmatprep.mubr.f32.mxu0 0.0
        %v911 = vand.u32 %v486, 4294901760
        %912 = vmatmul.mubr.f32.gmra.mrb[0].mxu0 %v911
        %v913 = vpop.f32.mrb[0].mxu0
        %v914 = vadd.f32 %v831, %v913
        %v915 = vpop.f32.mrb[0].mxu0
        %916 = vdwg.mxu0
        %917 = vmatprep.subr.mxu0 0.0
        %v918 = vand.u32 %v489, 4294901760
        %919 = vmatpush1.xpose.msra.mxu0 %v918
        %920 = vmatprep.subr.mxu0 0.0
        %v921 = vand.u32 %v492, 4294901760
        %922 = vmatpush1.xpose.msra.mxu0 %v921
        %923 = vmatprep.subr.mxu0 0.0
        %924 = vmatpush1.xpose.msra.mxu0 0.0
        %925 = vmatprep.subr.mxu0 0.0
        %926 = vmatpush1.xpose.msra.mxu0 0.0
        %927 = vmatprep.subr.mxu0 0.0
        %928 = vmatpush1.xpose.msra.mxu0 0.0
        %929 = vmatprep.subr.mxu0 0.0
        %930 = vmatpush1.xpose.msra.mxu0 0.0
        %931 = vmatprep.subr.mxu0 0.0
        %932 = vmatpush1.xpose.msra.mxu0 0.0
        %933 = vmatprep.subr.mxu0 0.0
        %934 = vmatpush1.xpose.msra.mxu0 0.0
        %935 = vmatprep.subr.mxu0 0.0
        %936 = vmatpush1.xpose.msra.mxu0 0.0
        %937 = vmatprep.subr.mxu0 0.0
        %938 = vmatpush1.xpose.msra.mxu0 0.0
        %939 = vmatprep.subr.mxu0 0.0
        %940 = vmatpush1.xpose.msra.mxu0 0.0
        %941 = vmatprep.subr.mxu0 0.0
        %942 = vmatpush1.xpose.msra.mxu0 0.0
        %943 = vmatprep.subr.mxu0 0.0
        %944 = vmatpush1.xpose.msra.mxu0 0.0
        %945 = vmatprep.subr.mxu0 0.0
        %946 = vmatpush1.xpose.msra.mxu0 0.0
        %947 = vmatprep.subr.mxu0 0.0
        %948 = vmatpush1.xpose.msra.mxu0 0.0
        %949 = vmatprep.subr.mxu0 0.0
        %950 = vmatpush1.xpose.msra.mxu0 0.0
        %951 = vmatprep.subr.mxu0 0.0
        %952 = vmatpush1.xpose.msra.mxu0 0.0
        %953 = vmatprep.subr.mxu0 0.0
        %954 = vmatpush1.xpose.msra.mxu0 0.0
        %955 = vmatprep.subr.mxu0 0.0
        %956 = vmatpush1.xpose.msra.mxu0 0.0
        %957 = vmatprep.subr.mxu0 0.0
        %958 = vmatpush1.xpose.msra.mxu0 0.0
        %959 = vmatprep.subr.mxu0 0.0
        %960 = vmatpush1.xpose.msra.mxu0 0.0
        %961 = vmatprep.subr.mxu0 0.0
        %962 = vmatpush1.xpose.msra.mxu0 0.0
        %963 = vmatprep.subr.mxu0 0.0
        %964 = vmatpush1.xpose.msra.mxu0 0.0
        %965 = vmatprep.subr.mxu0 0.0
        %966 = vmatpush1.xpose.msra.mxu0 0.0
        %967 = vmatprep.subr.mxu0 0.0
        %968 = vmatpush1.xpose.msra.mxu0 0.0
        %969 = vmatprep.subr.mxu0 0.0
        %970 = vmatpush1.xpose.msra.mxu0 0.0
        %971 = vmatprep.subr.mxu0 0.0
        %972 = vmatpush1.xpose.msra.mxu0 0.0
        %973 = vmatprep.subr.mxu0 0.0
        %974 = vmatpush1.xpose.msra.mxu0 0.0
        %975 = vmatprep.subr.mxu0 0.0
        %976 = vmatpush1.xpose.msra.mxu0 0.0
        %977 = vmatprep.subr.mxu0 0.0
        %978 = vmatpush1.xpose.msra.mxu0 0.0
        %979 = vmatprep.subr.mxu0 0.0
        %980 = vmatpush1.xpose.msra.mxu0 0.0
        %981 = vmatprep.subr.mxu0 0.0
        %982 = vmatpush1.xpose.msra.mxu0 0.0
        %983 = vmatprep.mubr.f32.mxu0 0.0
        %v984 = vand.u32 %v483, 4294901760
        %985 = vmatmul.mubr.f32.gmra.mrb[0].mxu0 %v984
        %v986 = vpop.f32.mrb[0].mxu0
        %v987 = vadd.f32 %v908, %v986
        %v988 = vpop.f32.mrb[0].mxu0
        %989 = vmatprep.mubr.f32.mxu0 0.0
        %v990 = vand.u32 %v486, 4294901760
        %991 = vmatmul.mubr.f32.gmra.mrb[0].mxu0 %v990
        %v992 = vpop.f32.mrb[0].mxu0
        %v993 = vadd.f32 %v914, %v992
        %v994 = vpop.f32.mrb[0].mxu0
        %995 = vdwg.mxu0
        %vm996 = vcmask 130048
        %997 = vst.msk [vmem:[%s206] sm:$0xff] %vm996, %v987
        %998 = vst.msk [vmem:[%s206 + $0x8] sm:$0xff] %vm996, %v993
        %s999 = sand.u32 %s112, 1
        %s1000 = scalar_lea.sflag [#allocation5], %s999
        %s1001 = sand.u32 %s112, 1
        %s1002 = smul.addr %s1001, 16
        %s1003 = scalar_lea.vmem [#allocation6], %s1002
        // Predicated region
        $region37: #{tpu_custom_call.1} parent=31 // pred_check
          %p1004 = pneg %p122
        $region38: #{tpu_custom_call.1} parent=31 // pred_check_branch
          %1006 = sbr.rel (%p1004) target = $region40
        $region39: #{tpu_custom_call.1} parent=31 // pred_region
          %s1008 = ssub.s32 256, 256
          %1009 = vsyncadd %s1000, %s1008
          %s1010 = smul.addr %s24, 2
          %s1011 = sadd.s32 %s25, %s1010
          %s1012 = smul.addr %s1011, 128
          %s1013 = scalar_lea.hbm %s3, %s1012
          %s1014 = sshll.u32 %s1003, 4
          %s1015 = int_to_ptr.vmem [resolvable:$true] %s1014
          %1020 = dma.vmem_to_hbm [thread:$0]  %s1015, 256, %s1013, %s1000, 128, 128, 8
        $region40: #{tpu_custom_call.1} parent=31 // pred_fallthru
          _
      $region32: #{tpu_custom_call.1} parent=5 // pred_fallthru
        _
      %p1021 = scmp.le.s32.totalorder 2, %s15
      // Predicated region
      $region41: #{tpu_custom_call.1} parent=5 // pred_check
        %p1022 = pneg %p1021
      $region42: #{tpu_custom_call.1} parent=5 // pred_check_branch
        %1024 = sbr.rel (%p1022) target = $region44
      $region43: #{tpu_custom_call.1} parent=5 // pred_region
        %s1025 = ssub.s32 %s15, 2
        // Predicated region
        $region45: #{tpu_custom_call.1} parent=43 // pred_check
          %p1026 = pneg %p128
        $region46: #{tpu_custom_call.1} parent=43 // pred_check_branch
          %1028 = sbr.rel (%p1026) target = $region48
        $region47: #{tpu_custom_call.1} parent=43 // pred_region
          %s1029 = sand.u32 %s113, 1
          %s1030 = scalar_lea.sflag [#allocation5], %s1029
          %s1031 = sand.u32 %s113, 1
          %s1032 = smul.addr %s1031, 16
          %s1033 = scalar_lea.vmem [#allocation6], %s1032
          %1034 = dma.done %s1030, 256
        $region48: #{tpu_custom_call.1} parent=43 // pred_fallthru
          _
      $region44: #{tpu_custom_call.1} parent=5 // pred_fallthru
        _
    $region6: #{tpu_custom_call.1} parent=1 // loop_footer
      %s19 = sadd.s32 1, %s15
    $region7: #{tpu_custom_call.1} parent=1 // loop_footer_branch
      %14 = sbr.rel target = $region3
    $region8: #{tpu_custom_call.1} parent=1 // loop_exit
      _
    %1035 = vsyncpa [#allocation4], 1
    %s1036 = scalar_lea.sflag [#allocation4], 1
    %1037 = vsyncpa %s1036, 1
    %1038 = vsyncpa [#allocation5], 1
    %s1039 = scalar_lea.sflag [#allocation5], 1
    %1040 = vsyncpa %s1039, 1

</llo_original>
